<compile_context>
chip_gen: v7x
topology: tpu7x:2x2x1
jax: 0.10.0
libtpu: 0.0.40
codegen_flags: <defaults>
</compile_context>

<pallas_src>
import jax
import jax.numpy as jnp
from jax.experimental import pallas as pl
from jax.experimental.pallas import tpu as pltpu


def _round_up(n, m):
    return ((n + m - 1) // m) * m


def _linear_kernel(x_ref, w_ref, b_ref, o_ref):
    x = x_ref[...]
    w = w_ref[...]
    if x.dtype != w.dtype:
        # bf16 path: cast x in-register so the HBM read of x stays f32 while
        # the MXU runs at its bf16-native rate; accumulation stays f32.
        x = x.astype(w.dtype)
    acc = jnp.dot(x, w, preferred_element_type=jnp.float32)
    o_ref[...] = (acc + b_ref[...]).astype(o_ref.dtype)


def prepare_params(w, b, *, compute_dtype=jnp.float32):
    """One-time parameter prep (hoisted out of the per-call forward wrapper).

    w: [d_in, d_out] (transpose of PyTorch nn.Linear.weight), b: [d_out].
    Pads d_out to a multiple of 128 (lane-dense output stores) and casts W to
    `compute_dtype` (f32 = exact parity, bf16 = MXU-native operands).
    """
    d_in, d_out = w.shape
    d_out_p = _round_up(d_out, 128)
    pad_n = d_out_p - d_out
    w_p = jnp.pad(w, ((0, 0), (0, pad_n))).astype(compute_dtype)
    b_p = jnp.pad(jnp.reshape(b, (1, -1)).astype(jnp.float32), ((0, 0), (0, pad_n)))
    return {"w": w_p, "b": b_p, "d_out": d_out}


def placement_logreg(x, params, *, block_b=512):
    """Forward pass of PlacementLogReg: y = x @ W + b (PyTorch nn.Linear)."""
    w_p = params["w"]
    bias_p = params["b"]
    d_out = params["d_out"]
    B, d_in = x.shape
    d_in_w, d_out_p = w_p.shape
    assert d_in == d_in_w, (d_in, d_in_w)
    out_dtype = x.dtype

    # Batch tile: dtype-dependent sublane quantum; default 512 rows amortizes
    # the ~0.35us per-grid-step overhead (vs ~63% of roofline at 256 rows).
    q = 8 if w_p.dtype.itemsize >= 4 else 16
    if B <= q:
        tb = B  # full-extent block, single grid step
    else:
        tb = max(q, _round_up(min(block_b, B), q))
        tb = min(tb, _round_up(B, q))
        # v7x megacore: give the "parallel" batch axis >= 2 grid steps so it
        # can shard across both TensorCores once the batch is big enough.
        if pl.cdiv(B, tb) < 2 and _round_up(B, q) >= 2 * q:
            tb = _round_up(pl.cdiv(B, 2), q)
    grid = (pl.cdiv(B, tb),)

    # VMEM budget: resident W + bias (single-buffered) + double-buffered
    # x / out tiles, 2x headroom for compiler scratch. Default scoped limits
    # (16 MiB v5e / 32 MiB v6e,v7x) are far below what we want to use.
    out_itemsize = jnp.dtype(out_dtype).itemsize
    working_set = (
        w_p.size * w_p.dtype.itemsize
        + bias_p.size * bias_p.dtype.itemsize
        + 2 * tb * d_in * x.dtype.itemsize
        + 2 * tb * d_out_p * out_itemsize
    )
    # TODO(synk): for very large d_in / d_out (working set beyond v7x's 64 MiB
    # VMEM) add a K ("arbitrary") and a d_out ("parallel") grid axis with an
    # f32 VMEM accumulator instead of keeping W fully resident.
    vmem_limit = int(min(max(2 * working_set + (2 << 20), 16 << 20), 64 << 20))

    cost = pl.CostEstimate(
        flops=2 * B * d_in * d_out_p,
        transcendentals=0,
        bytes_accessed=(
            B * d_in * x.dtype.itemsize
            + w_p.size * w_p.dtype.itemsize
            + bias_p.size * bias_p.dtype.itemsize
            + B * d_out_p * out_itemsize
        ),
    )

    # Constant-index blocks (W, bias) are fetched once; request single
    # buffering so they do not pay the double-buffer VMEM tax.
    resident = pl.Buffered(1)

    out_p = pl.pallas_call(
        _linear_kernel,
        out_shape=jax.ShapeDtypeStruct((B, d_out_p), out_dtype),
        grid=grid,
        in_specs=[
            pl.BlockSpec((tb, d_in), lambda i: (i, 0)),        # x tile (pipelined)
            pl.BlockSpec((d_in, d_out_p), lambda i: (0, 0),    # W (VMEM resident)
                         pipeline_mode=resident),
            pl.BlockSpec((1, d_out_p), lambda i: (0, 0),       # bias (VMEM resident)
                         pipeline_mode=resident),
        ],
        out_specs=pl.BlockSpec((tb, d_out_p), lambda i: (i, 0)),
        compiler_params=pltpu.CompilerParams(
            dimension_semantics=("parallel",),   # batch axis shards across v7x TCs
            vmem_limit_bytes=vmem_limit,
        ),
        cost_estimate=cost,
    )(x, w_p, bias_p)

    # Strip only the d_out lane padding (no batch padding was ever added).
    return out_p if d_out == d_out_p else out_p[:, :d_out]


def init_params(key, input_size, output_size):
    """PyTorch-style nn.Linear init: uniform +/- 1/sqrt(fan_in)."""
    kw, kb = jax.random.split(key)
    bound = 1.0 / float(input_size) ** 0.5
    w = jax.random.uniform(kw, (input_size, output_size), jnp.float32, -bound, bound)
    b = jax.random.uniform(kb, (output_size,), jnp.float32, -bound, bound)
    return w, b


if __name__ == "__main__":
    key = jax.random.PRNGKey(0)
    k_x, k_x2, k_p = jax.random.split(key, 3)

    input_size, output_size = 32, 16
    w, b = init_params(k_p, input_size, output_size)

    def reference(xv):
        return xv @ w + b

    # f32 path: exact forward semantics of the PyTorch module.
    params_f32 = prepare_params(w, b)  # one-time param prep (pad hoisted here)
    x = jax.random.normal(k_x, (2, input_size), jnp.float32)
    out = jax.block_until_ready(placement_logreg(x, params_f32))
    assert out.shape == (2, output_size)
    assert jnp.allclose(out, reference(x), atol=1e-4, rtol=1e-4)

    # Multi-step grid with a ragged last batch block (no batch padding).
    x2 = jax.random.normal(k_x2, (42, input_size), jnp.float32)
    out2 = jax.block_until_ready(placement_logreg(x2, params_f32, block_b=16))
    assert out2.shape == (42, output_size)
    assert jnp.allclose(out2, reference(x2), atol=1e-4, rtol=1e-4)

    # bf16-operand path (W pre-cast once, x cast in-kernel, f32 accumulation).
    params_bf16 = prepare_params(w, b, compute_dtype=jnp.bfloat16)
    out_bf16 = jax.block_until_ready(placement_logreg(x, params_bf16))
    assert jnp.allclose(out_bf16, reference(x), atol=5e-2, rtol=5e-2)

    print("KERNEL_OK")
</pallas_src>

<mosaic_0001>
module attributes {stable_mosaic.version = 11 : i64} {
  func.func @_linear_kernel(%arg0: i32, %arg1: memref<2x32xf32, #tpu.memory_space<vmem>>, %arg2: memref<32x128xf32, #tpu.memory_space<vmem>>, %arg3: memref<1x128xf32, #tpu.memory_space<vmem>>, %arg4: memref<2x128xf32, #tpu.memory_space<vmem>>) attributes {dimension_semantics = [#tpu.dimension_semantics<parallel>], iteration_bounds = array<i64: 1>, scalar_prefetch = 0 : i64, scratch_operands = 0 : i64, tpu.core_type = #tpu.core_type<tc>, window_params = [{transform_indices = @transform_0, window_bounds = array<i64: 2, 32>}, {pipeline_mode = #tpu.pipeline_mode<synchronous>, transform_indices = @transform_1, window_bounds = array<i64: 32, 128>}, {pipeline_mode = #tpu.pipeline_mode<synchronous>, transform_indices = @transform_2, window_bounds = array<i64: 1, 128>}, {transform_indices = @transform_3, window_bounds = array<i64: 2, 128>}]} {
    %c0 = arith.constant 0 : index
    %c0_0 = arith.constant 0 : index
    %0 = vector.load %arg1[%c0, %c0_0] : memref<2x32xf32, #tpu.memory_space<vmem>>, vector<2x32xf32>
    %c0_1 = arith.constant 0 : index
    %c0_2 = arith.constant 0 : index
    %1 = vector.load %arg2[%c0_1, %c0_2] : memref<32x128xf32, #tpu.memory_space<vmem>>, vector<32x128xf32>
    %cst = arith.constant dense<0.000000e+00> : vector<2x128xf32>
    %2 = tpu.matmul %0, %1, %cst {dimension_numbers = #tpu.dot_dimension_numbers<[1], [0], [0], [1], [0, 0, 1, 1], [], []>} : vector<2x32xf32>, vector<32x128xf32>, vector<2x128xf32> -> vector<2x128xf32>
    %c0_3 = arith.constant 0 : index
    %c0_4 = arith.constant 0 : index
    %3 = vector.load %arg3[%c0_3, %c0_4] : memref<1x128xf32, #tpu.memory_space<vmem>>, vector<1x128xf32>
    %4 = vector.broadcast %3 : vector<1x128xf32> to vector<2x128xf32>
    %5 = arith.addf %2, %4 : vector<2x128xf32>
    %c0_5 = arith.constant 0 : index
    %c0_6 = arith.constant 0 : index
    %6 = vector.load %arg4[%c0_5, %c0_6] : memref<2x128xf32, #tpu.memory_space<vmem>>, vector<2x128xf32>
    tpu.vector_store %arg4[%c0_5, %c0_6], %5 {strides = array<i32>} : memref<2x128xf32, #tpu.memory_space<vmem>>, vector<2x128xf32>,
    return
  }
  func.func @transform_0(%arg0: i32) -> (i32, i32) {
    %c0_i32 = arith.constant 0 : i32
    %c0_i32_0 = arith.constant 0 : i32
    return %arg0, %c0_i32 : i32, i32
  }
  func.func @transform_1(%arg0: i32) -> (i32, i32) {
    %c0_i32 = arith.constant 0 : i32
    %c0_i32_0 = arith.constant 0 : i32
    %c0_i32_1 = arith.constant 0 : i32
    return %c0_i32, %c0_i32_0 : i32, i32
  }
  func.func @transform_2(%arg0: i32) -> (i32, i32) {
    %c0_i32 = arith.constant 0 : i32
    %c0_i32_0 = arith.constant 0 : i32
    %c0_i32_1 = arith.constant 0 : i32
    return %c0_i32, %c0_i32_0 : i32, i32
  }
  func.func @transform_3(%arg0: i32) -> (i32, i32) {
    %c0_i32 = arith.constant 0 : i32
    %c0_i32_0 = arith.constant 0 : i32
    return %arg0, %c0_i32 : i32, i32
  }
}

</mosaic_0001>

<llo_original>
// kernel: tpu_custom_call.1
$region0: #{tpu_custom_call.1}
  #allocation0 [shape = 'u32[]', space=smem, size = 0x4, offset = 0x4, fixed_abs, tag = 'smem constant byte address 0x4 - core index']
  #allocation1 [shape = 'u32[144,128]{1,0:T(1,128)}', space=vmem, size = 0x12000, scoped, tag = 'internal scratch']
  %s0 = inlined_call_operand.hbm [shape: f32[2,32], index: 0, kind: input, shape index: {}]
  %s1 = inlined_call_operand.hbm [shape: f32[32,128], index: 1, kind: input, shape index: {}]
  %s2 = inlined_call_operand.vmem [shape: f32[1,128], index: 2, kind: input, shape index: {}]
  %s3 = inlined_call_operand.hbm [shape: f32[2,128], index: 3, kind: output, shape index: {}]
  %s4 = sld [smem:[#allocation0]]
  $region30: #{tpu_custom_call.1} parent=0
    _
  %s6 = ssub.s32 1, %s4
  %s7 = scalar_select 0, %s6, %s4
  $region1: #{tpu_custom_call.1} parent=0
    #allocation2 [shape = 'u8[1024]{0}', space=vmem, size = 0x400, scoped, tag = 'input window, operand 0, single buffered']
    #allocation3 [shape = 's32[1]{0}', space=sflag, size = 0x4, scoped, tag = 'scoped memory for tpu_custom_call.1']
    #allocation4 [shape = 's32[1]{0}', space=sflag, size = 0x4, scoped, tag = 'scoped memory for tpu_custom_call.1']
    #allocation5 [shape = 'u8[16384]{0}', space=vmem, size = 0x4000, scoped, tag = 'input window, operand 1, single buffered']
    #allocation6 [shape = 's32[1]{0}', space=sflag, size = 0x4, scoped, tag = 'scoped memory for tpu_custom_call.1']
    #allocation7 [shape = 'u8[1024]{0}', space=vmem, size = 0x400, scoped, tag = 'output window, operand 0, single buffered']
    %8 = vsyncpa [#allocation3], 0
    %9 = vsyncpa [#allocation6], 0
    %10 = vsyncpa [#allocation4], 0
    // Predicated region
    $region2: #{tpu_custom_call.1} parent=1 // pred_check
      _
    $region3: #{tpu_custom_call.1} parent=1 // pred_check_branch
      %12 = sbr.rel (0) target = $region5
    $region4: #{tpu_custom_call.1} parent=1 // pred_region
      %s14 = ssub.s32 32, 32
      %15 = vsyncadd [#allocation3], %s14
      %s17 = sshll.u32 [#allocation2], 4
      %s18 = int_to_ptr.vmem [resolvable:$true] %s17
      %20 = dma.hbm_to_vmem [thread:$0]  %s0, 32, %s18, [#allocation3]
    $region5: #{tpu_custom_call.1} parent=1 // pred_fallthru
      _
    // Predicated region
    $region6: #{tpu_custom_call.1} parent=1 // pred_check
      _
    $region7: #{tpu_custom_call.1} parent=1 // pred_check_branch
      %22 = sbr.rel (0) target = $region9
    $region8: #{tpu_custom_call.1} parent=1 // pred_region
      %s24 = ssub.s32 512, 512
      %25 = vsyncadd [#allocation6], %s24
      %s26 = sshll.u32 [#allocation5], 4
      %s27 = int_to_ptr.vmem [resolvable:$true] %s26
      %32 = dma.hbm_to_vmem [thread:$0]  %s1, 512, %s27, [#allocation6], 128, 128, 8
    $region9: #{tpu_custom_call.1} parent=1 // pred_fallthru
      _
    // Predicated region
    $region10: #{tpu_custom_call.1} parent=1 // pred_check
      _
    $region11: #{tpu_custom_call.1} parent=1 // pred_check_branch
      %34 = sbr.rel (0) target = $region13
    $region12: #{tpu_custom_call.1} parent=1 // pred_region
      _
    $region13: #{tpu_custom_call.1} parent=1 // pred_fallthru
      _
    // Predicated region
    $region14: #{tpu_custom_call.1} parent=1 // pred_check
      _
    $region15: #{tpu_custom_call.1} parent=1 // pred_check_branch
      %36 = sbr.rel (0) target = $region17
    $region16: #{tpu_custom_call.1} parent=1 // pred_region
      %37 = dma.done [#allocation3], 32
    $region17: #{tpu_custom_call.1} parent=1 // pred_fallthru
      _
    // Predicated region
    $region18: #{tpu_custom_call.1} parent=1 // pred_check
      _
    $region19: #{tpu_custom_call.1} parent=1 // pred_check_branch
      %39 = sbr.rel (0) target = $region21
    $region20: #{tpu_custom_call.1} parent=1 // pred_region
      %40 = dma.done [#allocation6], 512
    $region21: #{tpu_custom_call.1} parent=1 // pred_fallthru
      _
    %v41 = vld [vmem:[#allocation2] sm:$0x3]
    %v42 = vld [vmem:[#allocation5] sm:$0xff]
    %v43 = vld [vmem:[#allocation5 + $0x8] sm:$0xff]
    %v44 = vld [vmem:[#allocation5 + $0x10] sm:$0xff]
    %v45 = vld [vmem:[#allocation5 + $0x18] sm:$0xff]
    %v46 = vld [vmem:[%s2] sm:$0x1]
    %v48 = vlaneseq
    %v49 = vshrl.u32 %v48, 7
    %v50 = vsub.s32 0, %v49
    %v51 = vrot.slane %v46, %v50
    %vm53 = vcmask 261120
    %v55 = vsel %vm53, %v41, 0
    %57 = vmatprep.subr.mxu0 0.0
    %58 = vmatpush1.msra.mxu0 %v42
    %59 = vmatprep.subr.mxu0 0.0
    %60 = vmatpush1.msra.mxu0 %v43
    %61 = vmatprep.subr.mxu0 0.0
    %62 = vmatpush1.msra.mxu0 %v44
    %63 = vmatprep.subr.mxu0 0.0
    %64 = vmatpush1.msra.mxu0 %v45
    %65 = vmatprep.subr.mxu0 0.0
    %66 = vmatpush1.msra.mxu0 0.0
    %67 = vmatprep.subr.mxu0 0.0
    %68 = vmatpush1.msra.mxu0 0.0
    %69 = vmatprep.subr.mxu0 0.0
    %70 = vmatpush1.msra.mxu0 0.0
    %71 = vmatprep.subr.mxu0 0.0
    %72 = vmatpush1.msra.mxu0 0.0
    %73 = vmatprep.subr.mxu0 0.0
    %74 = vmatpush1.msra.mxu0 0.0
    %75 = vmatprep.subr.mxu0 0.0
    %76 = vmatpush1.msra.mxu0 0.0
    %77 = vmatprep.subr.mxu0 0.0
    %78 = vmatpush1.msra.mxu0 0.0
    %79 = vmatprep.subr.mxu0 0.0
    %80 = vmatpush1.msra.mxu0 0.0
    %81 = vmatprep.subr.mxu0 0.0
    %82 = vmatpush1.msra.mxu0 0.0
    %83 = vmatprep.subr.mxu0 0.0
    %84 = vmatpush1.msra.mxu0 0.0
    %85 = vmatprep.subr.mxu0 0.0
    %86 = vmatpush1.msra.mxu0 0.0
    %87 = vmatprep.subr.mxu0 0.0
    %88 = vmatpush1.msra.mxu0 0.0
    %89 = vmatprep.subr.mxu0 0.0
    %90 = vmatpush1.msra.mxu0 0.0
    %91 = vmatprep.subr.mxu0 0.0
    %92 = vmatpush1.msra.mxu0 0.0
    %93 = vmatprep.subr.mxu0 0.0
    %94 = vmatpush1.msra.mxu0 0.0
    %95 = vmatprep.subr.mxu0 0.0
    %96 = vmatpush1.msra.mxu0 0.0
    %97 = vmatprep.subr.mxu0 0.0
    %98 = vmatpush1.msra.mxu0 0.0
    %99 = vmatprep.subr.mxu0 0.0
    %100 = vmatpush1.msra.mxu0 0.0
    %101 = vmatprep.subr.mxu0 0.0
    %102 = vmatpush1.msra.mxu0 0.0
    %103 = vmatprep.subr.mxu0 0.0
    %104 = vmatpush1.msra.mxu0 0.0
    %105 = vmatprep.subr.mxu0 0.0
    %106 = vmatpush1.msra.mxu0 0.0
    %107 = vmatprep.subr.mxu0 0.0
    %108 = vmatpush1.msra.mxu0 0.0
    %109 = vmatprep.subr.mxu0 0.0
    %110 = vmatpush1.msra.mxu0 0.0
    %111 = vmatprep.subr.mxu0 0.0
    %112 = vmatpush1.msra.mxu0 0.0
    %113 = vmatprep.subr.mxu0 0.0
    %114 = vmatpush1.msra.mxu0 0.0
    %115 = vmatprep.subr.mxu0 0.0
    %116 = vmatpush1.msra.mxu0 0.0
    %117 = vmatprep.subr.mxu0 0.0
    %118 = vmatpush1.msra.mxu0 0.0
    %119 = vmatprep.subr.mxu0 0.0
    %120 = vmatpush1.msra.mxu0 0.0
    %121 = vmatprep.mubr.f32.mxu0 0.0
    %122 = vmatmul.mubr.f32.gmra.mrb[0].mxu0 %v55
    %v123 = vpop.f32.mrb[0].mxu0
    %v124 = vadd.f32 %v51, %v123
    %v125 = vpop.f32.mrb[0].mxu0
    %126 = vdwg.mxu0
    %127 = vst [vmem:[#allocation7] sm:$0x3] %v124
    // Predicated region
    $region22: #{tpu_custom_call.1} parent=1 // pred_check
      _
    $region23: #{tpu_custom_call.1} parent=1 // pred_check_branch
      %129 = sbr.rel (0) target = $region25
    $region24: #{tpu_custom_call.1} parent=1 // pred_region
      %s131 = ssub.s32 32, 32
      %132 = vsyncadd [#allocation4], %s131
      %s134 = sshll.u32 [#allocation7], 4
      %s135 = int_to_ptr.vmem [resolvable:$true] %s134
      %137 = dma.vmem_to_hbm [thread:$0]  %s135, 32, %s3, [#allocation4]
    $region25: #{tpu_custom_call.1} parent=1 // pred_fallthru
      _
    // Predicated region
    $region26: #{tpu_custom_call.1} parent=1 // pred_check
      _
    $region27: #{tpu_custom_call.1} parent=1 // pred_check_branch
      %139 = sbr.rel (0) target = $region29
    $region28: #{tpu_custom_call.1} parent=1 // pred_region
      %140 = dma.done [#allocation4], 32
    $region29: #{tpu_custom_call.1} parent=1 // pred_fallthru
      _
    %141 = vsyncpa [#allocation3], 1
    %142 = vsyncpa [#allocation6], 1
    %143 = vsyncpa [#allocation4], 1

</llo_original>
